<compile_context>
chip_gen: v7x
topology: tpu7x:2x2x1
jax: 0.10.0
libtpu: 0.0.40
codegen_flags: <defaults>
</compile_context>

<pallas_src>
import numpy as np
import jax
import jax.numpy as jnp
from jax.experimental import pallas as pl
from jax.experimental.pallas import tpu as pltpu

NUM_K = 10          # conv1 output channels
POOL_H = 33         # 99 // 3 pooled rows
IN_FLAT = 200       # 100 * 2 input values per sample (row-major flatten)
FC1_IN = 330        # 10 * 33 real features
FEAT_W = 384        # 330 padded to 3 lane tiles
FC1_OUT = 200
FC1_PAD = 256       # fc1 width padded to 2 lane tiles
FC2_OUT = 26
OUT_PAD = 128       # fc2 width padded to 1 lane tile
TILE_N_MAX = 256    # batch tile (rows per grid step)


def _round_up(a, b):
    return (a + b - 1) // b * b


def fused_gesture_kernel(x_ref, wc_ref, bc_ref, w1_ref, b1_ref, w2_ref, b2_ref,
                         o_ref):
    # x_ref : (T, 200) bf16          wc_ref: (200, 3*384) bf16   bc_ref: (1, 384) f32
    # w1_ref: (384, 256) bf16        b1_ref: (1, 256) f32
    # w2_ref: (256, 128) bf16        b2_ref: (1, 128) f32        o_ref : (T, 128) f32
    x = x_ref[...]

    # conv2x2 over all 99 rows x 10 channels as one dense matmul; columns are
    # grouped by pooling tap, so MaxPool(3,1) is a max of 3 lane-aligned slices.
    z = jnp.dot(x, wc_ref[...], preferred_element_type=jnp.float32)   # (T, 1152)
    m = jnp.maximum(jnp.maximum(z[:, :FEAT_W], z[:, FEAT_W:2 * FEAT_W]),
                    z[:, 2 * FEAT_W:3 * FEAT_W])                      # (T, 384)
    # relu(max_t(z_t) + b) == max_t relu(z_t + b)  (both monotone).
    feat = jnp.maximum(m + bc_ref[...], 0.0)   # channel-major (c*33 + j), padded

    h1 = jnp.dot(feat.astype(jnp.bfloat16), w1_ref[...],
                 preferred_element_type=jnp.float32) + b1_ref[...]
    h1 = jnp.maximum(h1, 0.0)                                         # (T, 256)

    h2 = jnp.dot(h1.astype(jnp.bfloat16), w2_ref[...],
                 preferred_element_type=jnp.float32) + b2_ref[...]
    h2 = jnp.maximum(h2, 0.0)                                         # (T, 128)

    # softmax over the 26 real logits; padded lanes masked so exp() == 0.
    col = jax.lax.broadcasted_iota(jnp.int32, h2.shape, 1)
    h2 = jnp.where(col < FC2_OUT, h2, -1e30)
    mx = jnp.max(h2, axis=-1, keepdims=True)
    e = jnp.exp(h2 - mx)
    s = jnp.sum(e, axis=-1, keepdims=True)
    o_ref[...] = (e / s).astype(o_ref.dtype)


# Static index pattern of the structured conv weight matrix:
#   Wc[2*(3*j + t) + k, t*FEAT_W + c*POOL_H + j] = conv_w[c, 0, k//2, k%2]
_T, _J, _C, _K = np.meshgrid(np.arange(3), np.arange(POOL_H), np.arange(NUM_K),
                             np.arange(4), indexing="ij")
_WC_ROWS = (2 * (3 * _J + _T) + _K).ravel()            # flat input index (r*2 + w)
_WC_COLS = (_T * FEAT_W + _C * POOL_H + _J).ravel()    # (tap, channel-major feature)


def _pack_params(params):
    wc4 = params["conv_w"].reshape(NUM_K, 4)           # tap k = 2*dh + dw
    wc = jnp.zeros((IN_FLAT, 3 * FEAT_W), jnp.float32)
    wc = wc.at[_WC_ROWS, _WC_COLS].set(wc4[_C.ravel(), _K.ravel()])

    bc = jnp.zeros((1, FEAT_W), jnp.float32)
    bc = bc.at[0, :FC1_IN].set(jnp.repeat(params["conv_b"], POOL_H))

    w1 = jnp.zeros((FEAT_W, FC1_PAD), jnp.float32)
    w1 = w1.at[:FC1_IN, :FC1_OUT].set(params["fc1_w"].T)
    b1 = jnp.zeros((1, FC1_PAD), jnp.float32).at[0, :FC1_OUT].set(params["fc1_b"])

    w2 = jnp.zeros((FC1_PAD, OUT_PAD), jnp.float32)
    w2 = w2.at[:FC1_OUT, :FC2_OUT].set(params["fc2_w"].T)
    b2 = jnp.zeros((1, OUT_PAD), jnp.float32).at[0, :FC2_OUT].set(params["fc2_b"])

    return (wc.astype(jnp.bfloat16), bc, w1.astype(jnp.bfloat16), b1,
            w2.astype(jnp.bfloat16), b2)


def gesture_cnn_forward(x, params):
    n = x.shape[0]
    wc, bc, w1, b1, w2, b2 = _pack_params(params)

    tile_n = min(TILE_N_MAX, _round_up(n, 16))
    n_pad = _round_up(n, tile_n)

    xf = x.reshape(n, IN_FLAT).astype(jnp.bfloat16)    # NCHW is contiguous -> free
    if n_pad != n:
        xf = jnp.pad(xf, ((0, n_pad - n), (0, 0)))

    out = pl.pallas_call(
        fused_gesture_kernel,
        out_shape=jax.ShapeDtypeStruct((n_pad, OUT_PAD), jnp.float32),
        grid=(n_pad // tile_n,),
        in_specs=[
            pl.BlockSpec((tile_n, IN_FLAT), lambda i: (i, 0)),
            pl.BlockSpec((IN_FLAT, 3 * FEAT_W), lambda i: (0, 0)),
            pl.BlockSpec((1, FEAT_W), lambda i: (0, 0)),
            pl.BlockSpec((FEAT_W, FC1_PAD), lambda i: (0, 0)),
            pl.BlockSpec((1, FC1_PAD), lambda i: (0, 0)),
            pl.BlockSpec((FC1_PAD, OUT_PAD), lambda i: (0, 0)),
            pl.BlockSpec((1, OUT_PAD), lambda i: (0, 0)),
        ],
        out_specs=pl.BlockSpec((tile_n, OUT_PAD), lambda i: (i, 0)),
        compiler_params=pltpu.CompilerParams(
            dimension_semantics=("parallel",)),
    )(xf, wc, bc, w1, b1, w2, b2)

    return out[:n, :FC2_OUT]


def init_params(key):
    ks = jax.random.split(key, 6)

    def u(k, shape, fan_in):  # PyTorch-style uniform(-1/sqrt(fan_in), 1/sqrt(fan_in))
        bound = 1.0 / jnp.sqrt(jnp.float32(fan_in))
        return jax.random.uniform(k, shape, jnp.float32, -bound, bound)

    return {
        "conv_w": u(ks[0], (NUM_K, 1, 2, 2), 4),          # Conv2d(1, 10, kernel=2)
        "conv_b": u(ks[1], (NUM_K,), 4),
        "fc1_w": u(ks[2], (FC1_OUT, FC1_IN), FC1_IN),     # Linear(330, 200)
        "fc1_b": u(ks[3], (FC1_OUT,), FC1_IN),
        "fc2_w": u(ks[4], (FC2_OUT, FC1_OUT), FC1_OUT),   # Linear(200, 26)
        "fc2_b": u(ks[5], (FC2_OUT,), FC1_OUT),
    }


if __name__ == "__main__":
    key = jax.random.PRNGKey(0)
    pkey, xkey = jax.random.split(key)
    params = init_params(pkey)
    # NCHW input; H=100, W=2 are fixed by the module (fc1 expects 10*33 = 330).
    x = jax.random.normal(xkey, (2, 1, 100, 2), jnp.float32)

    out = jax.jit(gesture_cnn_forward)(x, params)
    jax.block_until_ready(out)
    assert out.shape == (2, FC2_OUT)
    assert bool(jnp.all(jnp.isfinite(out)))
    # softmax rows must sum to 1 (computed in f32 inside the kernel)
    assert bool(jnp.allclose(out.sum(axis=1), 1.0, atol=1e-3))
    print("KERNEL_OK")
</pallas_src>

<mosaic_0001>
module attributes {stable_mosaic.version = 11 : i64} {
  func.func @fused_gesture_kernel(%arg0: i32, %arg1: memref<16x200xbf16, #tpu.memory_space<vmem>>, %arg2: memref<200x1152xbf16, #tpu.memory_space<vmem>>, %arg3: memref<1x384xf32, #tpu.memory_space<vmem>>, %arg4: memref<384x256xbf16, #tpu.memory_space<vmem>>, %arg5: memref<1x256xf32, #tpu.memory_space<vmem>>, %arg6: memref<256x128xbf16, #tpu.memory_space<vmem>>, %arg7: memref<1x128xf32, #tpu.memory_space<vmem>>, %arg8: memref<16x128xf32, #tpu.memory_space<vmem>>) attributes {dimension_semantics = [#tpu.dimension_semantics<parallel>], iteration_bounds = array<i64: 1>, scalar_prefetch = 0 : i64, scratch_operands = 0 : i64, tpu.core_type = #tpu.core_type<tc>, window_params = [{transform_indices = @transform_0, window_bounds = array<i64: 16, 200>}, {pipeline_mode = #tpu.pipeline_mode<synchronous>, transform_indices = @transform_1, window_bounds = array<i64: 200, 1152>}, {pipeline_mode = #tpu.pipeline_mode<synchronous>, transform_indices = @transform_2, window_bounds = array<i64: 1, 384>}, {pipeline_mode = #tpu.pipeline_mode<synchronous>, transform_indices = @transform_3, window_bounds = array<i64: 384, 256>}, {pipeline_mode = #tpu.pipeline_mode<synchronous>, transform_indices = @transform_4, window_bounds = array<i64: 1, 256>}, {pipeline_mode = #tpu.pipeline_mode<synchronous>, transform_indices = @transform_5, window_bounds = array<i64: 256, 128>}, {pipeline_mode = #tpu.pipeline_mode<synchronous>, transform_indices = @transform_6, window_bounds = array<i64: 1, 128>}, {transform_indices = @transform_7, window_bounds = array<i64: 16, 128>}]} {
    %c0 = arith.constant 0 : index
    %c0_0 = arith.constant 0 : index
    %0 = vector.load %arg1[%c0, %c0_0] : memref<16x200xbf16, #tpu.memory_space<vmem>>, vector<16x200xbf16>
    %c0_1 = arith.constant 0 : index
    %c0_2 = arith.constant 0 : index
    %1 = vector.load %arg2[%c0_1, %c0_2] : memref<200x1152xbf16, #tpu.memory_space<vmem>>, vector<200x1152xbf16>
    %cst = arith.constant dense<0.000000e+00> : vector<16x1152xf32>
    %2 = tpu.matmul %0, %1, %cst {dimension_numbers = #tpu.dot_dimension_numbers<[1], [0], [0], [1], [0, 0, 1, 1], [], []>} : vector<16x200xbf16>, vector<200x1152xbf16>, vector<16x1152xf32> -> vector<16x1152xf32>
    %3 = vector.extract_strided_slice %2 {offsets = [0, 0], sizes = [16, 384], strides = [1, 1]} : vector<16x1152xf32> to vector<16x384xf32>
    %4 = vector.extract_strided_slice %2 {offsets = [0, 384], sizes = [16, 384], strides = [1, 1]} : vector<16x1152xf32> to vector<16x384xf32>
    %5 = arith.maximumf %3, %4 : vector<16x384xf32>
    %6 = vector.extract_strided_slice %2 {offsets = [0, 768], sizes = [16, 384], strides = [1, 1]} : vector<16x1152xf32> to vector<16x384xf32>
    %7 = arith.maximumf %5, %6 : vector<16x384xf32>
    %c0_3 = arith.constant 0 : index
    %c0_4 = arith.constant 0 : index
    %8 = vector.load %arg3[%c0_3, %c0_4] : memref<1x384xf32, #tpu.memory_space<vmem>>, vector<1x384xf32>
    %9 = vector.broadcast %8 : vector<1x384xf32> to vector<16x384xf32>
    %10 = arith.addf %7, %9 : vector<16x384xf32>
    %cst_5 = arith.constant 0.000000e+00 : f32
    %11 = vector.broadcast %cst_5 : f32 to vector<16x384xf32>
    %12 = arith.maximumf %10, %11 : vector<16x384xf32>
    %13 = arith.truncf %12 : vector<16x384xf32> to vector<16x384xbf16>
    %c0_6 = arith.constant 0 : index
    %c0_7 = arith.constant 0 : index
    %14 = vector.load %arg4[%c0_6, %c0_7] : memref<384x256xbf16, #tpu.memory_space<vmem>>, vector<384x256xbf16>
    %cst_8 = arith.constant dense<0.000000e+00> : vector<16x256xf32>
    %15 = tpu.matmul %13, %14, %cst_8 {dimension_numbers = #tpu.dot_dimension_numbers<[1], [0], [0], [1], [0, 0, 1, 1], [], []>} : vector<16x384xbf16>, vector<384x256xbf16>, vector<16x256xf32> -> vector<16x256xf32>
    %c0_9 = arith.constant 0 : index
    %c0_10 = arith.constant 0 : index
    %16 = vector.load %arg5[%c0_9, %c0_10] : memref<1x256xf32, #tpu.memory_space<vmem>>, vector<1x256xf32>
    %17 = vector.broadcast %16 : vector<1x256xf32> to vector<16x256xf32>
    %18 = arith.addf %15, %17 : vector<16x256xf32>
    %cst_11 = arith.constant 0.000000e+00 : f32
    %19 = vector.broadcast %cst_11 : f32 to vector<16x256xf32>
    %20 = arith.maximumf %18, %19 : vector<16x256xf32>
    %21 = arith.truncf %20 : vector<16x256xf32> to vector<16x256xbf16>
    %c0_12 = arith.constant 0 : index
    %c0_13 = arith.constant 0 : index
    %22 = vector.load %arg6[%c0_12, %c0_13] : memref<256x128xbf16, #tpu.memory_space<vmem>>, vector<256x128xbf16>
    %cst_14 = arith.constant dense<0.000000e+00> : vector<16x128xf32>
    %23 = tpu.matmul %21, %22, %cst_14 {dimension_numbers = #tpu.dot_dimension_numbers<[1], [0], [0], [1], [0, 0, 1, 1], [], []>} : vector<16x256xbf16>, vector<256x128xbf16>, vector<16x128xf32> -> vector<16x128xf32>
    %c0_15 = arith.constant 0 : index
    %c0_16 = arith.constant 0 : index
    %24 = vector.load %arg7[%c0_15, %c0_16] : memref<1x128xf32, #tpu.memory_space<vmem>>, vector<1x128xf32>
    %25 = vector.broadcast %24 : vector<1x128xf32> to vector<16x128xf32>
    %26 = arith.addf %23, %25 : vector<16x128xf32>
    %cst_17 = arith.constant 0.000000e+00 : f32
    %27 = vector.broadcast %cst_17 : f32 to vector<16x128xf32>
    %28 = arith.maximumf %26, %27 : vector<16x128xf32>
    %29 = tpu.iota {dimensions = array<i32: 1>} : vector<16x128xi32>
    %c26_i32 = arith.constant 26 : i32
    %30 = vector.broadcast %c26_i32 : i32 to vector<16x128xi32>
    %31 = arith.cmpi slt, %29, %30 : vector<16x128xi32>
    %cst_18 = arith.constant -1.000000e+30 : f32
    %32 = vector.broadcast %cst_18 : f32 to vector<16x128xf32>
    %33 = arith.select %31, %28, %32 : vector<16x128xi1>, vector<16x128xf32>
    %cst_19 = arith.constant dense<0xFF800000> : vector<16xf32>
    %34 = vector.multi_reduction <maximumf>, %33, %cst_19 [1] : vector<16x128xf32> to vector<16xf32>
    %35 = vector.shape_cast %34 : vector<16xf32> to vector<16x1xf32>
    %36 = vector.broadcast %35 : vector<16x1xf32> to vector<16x128xf32>
    %37 = arith.subf %33, %36 : vector<16x128xf32>
    %38 = math.exp %37 : vector<16x128xf32>
    %cst_20 = arith.constant dense<0.000000e+00> : vector<16xf32>
    %39 = vector.multi_reduction <add>, %38, %cst_20 [1] : vector<16x128xf32> to vector<16xf32>
    %40 = vector.shape_cast %39 : vector<16xf32> to vector<16x1xf32>
    %41 = vector.broadcast %40 : vector<16x1xf32> to vector<16x128xf32>
    %42 = arith.divf %38, %41 : vector<16x128xf32>
    %c0_21 = arith.constant 0 : index
    %c0_22 = arith.constant 0 : index
    %43 = vector.load %arg8[%c0_21, %c0_22] : memref<16x128xf32, #tpu.memory_space<vmem>>, vector<16x128xf32>
    tpu.vector_store %arg8[%c0_21, %c0_22], %42 {strides = array<i32>} : memref<16x128xf32, #tpu.memory_space<vmem>>, vector<16x128xf32>,
    return
  }
  func.func @transform_0(%arg0: i32) -> (i32, i32) {
    %c0_i32 = arith.constant 0 : i32
    %c0_i32_0 = arith.constant 0 : i32
    return %arg0, %c0_i32 : i32, i32
  }
  func.func @transform_1(%arg0: i32) -> (i32, i32) {
    %c0_i32 = arith.constant 0 : i32
    %c0_i32_0 = arith.constant 0 : i32
    %c0_i32_1 = arith.constant 0 : i32
    return %c0_i32, %c0_i32_0 : i32, i32
  }
  func.func @transform_2(%arg0: i32) -> (i32, i32) {
    %c0_i32 = arith.constant 0 : i32
    %c0_i32_0 = arith.constant 0 : i32
    %c0_i32_1 = arith.constant 0 : i32
    return %c0_i32, %c0_i32_0 : i32, i32
  }
  func.func @transform_3(%arg0: i32) -> (i32, i32) {
    %c0_i32 = arith.constant 0 : i32
    %c0_i32_0 = arith.constant 0 : i32
    %c0_i32_1 = arith.constant 0 : i32
    return %c0_i32, %c0_i32_0 : i32, i32
  }
  func.func @transform_4(%arg0: i32) -> (i32, i32) {
    %c0_i32 = arith.constant 0 : i32
    %c0_i32_0 = arith.constant 0 : i32
    %c0_i32_1 = arith.constant 0 : i32
    return %c0_i32, %c0_i32_0 : i32, i32
  }
  func.func @transform_5(%arg0: i32) -> (i32, i32) {
    %c0_i32 = arith.constant 0 : i32
    %c0_i32_0 = arith.constant 0 : i32
    %c0_i32_1 = arith.constant 0 : i32
    return %c0_i32, %c0_i32_0 : i32, i32
  }
  func.func @transform_6(%arg0: i32) -> (i32, i32) {
    %c0_i32 = arith.constant 0 : i32
    %c0_i32_0 = arith.constant 0 : i32
    %c0_i32_1 = arith.constant 0 : i32
    return %c0_i32, %c0_i32_0 : i32, i32
  }
  func.func @transform_7(%arg0: i32) -> (i32, i32) {
    %c0_i32 = arith.constant 0 : i32
    %c0_i32_0 = arith.constant 0 : i32
    return %arg0, %c0_i32 : i32, i32
  }
}

</mosaic_0001>

<llo_original>
// kernel: gesture_cnn_forward.1
$region0: #{gesture_cnn_forward.1}
  #allocation0 [shape = 'u32[]', space=smem, size = 0x4, offset = 0x4, fixed_abs, tag = 'smem constant byte address 0x4 - core index']
  #allocation1 [shape = 'u32[144,128]{1,0:T(1,128)}', space=vmem, size = 0x12000, scoped, tag = 'internal scratch']
  %s0 = inlined_call_operand.vmem [shape: bf16[16,200], index: 0, kind: input, shape index: {}]
  %s1 = inlined_call_operand.vmem [shape: bf16[200,1152], index: 1, kind: input, shape index: {}]
  %s2 = inlined_call_operand.vmem [shape: f32[1,384], index: 2, kind: input, shape index: {}]
  %s3 = inlined_call_operand.vmem [shape: bf16[384,256], index: 3, kind: input, shape index: {}]
  %s4 = inlined_call_operand.vmem [shape: f32[1,256], index: 4, kind: input, shape index: {}]
  %s5 = inlined_call_operand.vmem [shape: bf16[256,128], index: 5, kind: input, shape index: {}]
  %s6 = inlined_call_operand.vmem [shape: f32[1,128], index: 6, kind: input, shape index: {}]
  %s7 = inlined_call_operand.vmem [shape: f32[16,128], index: 7, kind: output, shape index: {}]
  %s8 = sld [smem:[#allocation0]]
  $region38: #{gesture_cnn_forward.1} parent=0
    _
  %s10 = ssub.s32 1, %s8
  %s11 = scalar_select 0, %s10, %s8
  // Predicated region
  $region2: #{gesture_cnn_forward.1} parent=0 // pred_check
    _
  $region3: #{gesture_cnn_forward.1} parent=0 // pred_check_branch
    %13 = sbr.rel (0) target = $region5
  $region4: #{gesture_cnn_forward.1} parent=0 // pred_region
    _
  $region5: #{gesture_cnn_forward.1} parent=0 // pred_fallthru
    _
  // Predicated region
  $region6: #{gesture_cnn_forward.1} parent=0 // pred_check
    _
  $region7: #{gesture_cnn_forward.1} parent=0 // pred_check_branch
    %15 = sbr.rel (0) target = $region9
  $region8: #{gesture_cnn_forward.1} parent=0 // pred_region
    _
  $region9: #{gesture_cnn_forward.1} parent=0 // pred_fallthru
    _
  // Predicated region
  $region10: #{gesture_cnn_forward.1} parent=0 // pred_check
    _
  $region11: #{gesture_cnn_forward.1} parent=0 // pred_check_branch
    %17 = sbr.rel (0) target = $region13
  $region12: #{gesture_cnn_forward.1} parent=0 // pred_region
    _
  $region13: #{gesture_cnn_forward.1} parent=0 // pred_fallthru
    _
  // Predicated region
  $region14: #{gesture_cnn_forward.1} parent=0 // pred_check
    _
  $region15: #{gesture_cnn_forward.1} parent=0 // pred_check_branch
    %19 = sbr.rel (0) target = $region17
  $region16: #{gesture_cnn_forward.1} parent=0 // pred_region
    _
  $region17: #{gesture_cnn_forward.1} parent=0 // pred_fallthru
    _
  // Predicated region
  $region18: #{gesture_cnn_forward.1} parent=0 // pred_check
    _
  $region19: #{gesture_cnn_forward.1} parent=0 // pred_check_branch
    %21 = sbr.rel (0) target = $region21
  $region20: #{gesture_cnn_forward.1} parent=0 // pred_region
    _
  $region21: #{gesture_cnn_forward.1} parent=0 // pred_fallthru
    _
  // Predicated region
  $region22: #{gesture_cnn_forward.1} parent=0 // pred_check
    _
  $region23: #{gesture_cnn_forward.1} parent=0 // pred_check_branch
    %23 = sbr.rel (0) target = $region25
  $region24: #{gesture_cnn_forward.1} parent=0 // pred_region
    _
  $region25: #{gesture_cnn_forward.1} parent=0 // pred_fallthru
    _
  // Predicated region
  $region26: #{gesture_cnn_forward.1} parent=0 // pred_check
    _
  $region27: #{gesture_cnn_forward.1} parent=0 // pred_check_branch
    %25 = sbr.rel (0) target = $region29
  $region28: #{gesture_cnn_forward.1} parent=0 // pred_region
    _
  $region29: #{gesture_cnn_forward.1} parent=0 // pred_fallthru
    _
  %v27 = vld [vmem:[%s0] sm:$0xff]
  %v28 = vld [vmem:[%s0 + $0x8] sm:$0xff]
  %v29 = vld [vmem:[%s1] sm:$0xff]
  %v30 = vld [vmem:[%s1 + $0x8] sm:$0xff]
  %v31 = vld [vmem:[%s1 + $0x10] sm:$0xff]
  %v32 = vld [vmem:[%s1 + $0x18] sm:$0xff]
  %v33 = vld [vmem:[%s1 + $0x20] sm:$0xf]
  %v34 = vld [vmem:[%s1 + $0x24] sm:$0xff]
  %v35 = vld [vmem:[%s1 + $0x2c] sm:$0xff]
  %v36 = vld [vmem:[%s1 + $0x34] sm:$0xff]
  %v37 = vld [vmem:[%s1 + $0x3c] sm:$0xff]
  %v38 = vld [vmem:[%s1 + $0x44] sm:$0xf]
  %v39 = vld [vmem:[%s1 + $0x48] sm:$0xff]
  %v40 = vld [vmem:[%s1 + $0x50] sm:$0xff]
  %v41 = vld [vmem:[%s1 + $0x58] sm:$0xff]
  %v42 = vld [vmem:[%s1 + $0x60] sm:$0xff]
  %v43 = vld [vmem:[%s1 + $0x68] sm:$0xf]
  %v44 = vld [vmem:[%s1 + $0x6c] sm:$0xff]
  %v45 = vld [vmem:[%s1 + $0x74] sm:$0xff]
  %v46 = vld [vmem:[%s1 + $0x7c] sm:$0xff]
  %v47 = vld [vmem:[%s1 + $0x84] sm:$0xff]
  %v48 = vld [vmem:[%s1 + $0x8c] sm:$0xf]
  %v49 = vld [vmem:[%s1 + $0x90] sm:$0xff]
  %v50 = vld [vmem:[%s1 + $0x98] sm:$0xff]
  %v51 = vld [vmem:[%s1 + $0xa0] sm:$0xff]
  %v52 = vld [vmem:[%s1 + $0xa8] sm:$0xff]
  %v53 = vld [vmem:[%s1 + $0xb0] sm:$0xf]
  %v54 = vld [vmem:[%s1 + $0xb4] sm:$0xff]
  %v55 = vld [vmem:[%s1 + $0xbc] sm:$0xff]
  %v56 = vld [vmem:[%s1 + $0xc4] sm:$0xff]
  %v57 = vld [vmem:[%s1 + $0xcc] sm:$0xff]
  %v58 = vld [vmem:[%s1 + $0xd4] sm:$0xf]
  %v59 = vld [vmem:[%s1 + $0xd8] sm:$0xff]
  %v60 = vld [vmem:[%s1 + $0xe0] sm:$0xff]
  %v61 = vld [vmem:[%s1 + $0xe8] sm:$0xff]
  %v62 = vld [vmem:[%s1 + $0xf0] sm:$0xff]
  %v63 = vld [vmem:[%s1 + $0xf8] sm:$0xf]
  %v64 = vld [vmem:[%s1 + $0xfc] sm:$0xff]
  %v65 = vld [vmem:[%s1 + $0x104] sm:$0xff]
  %v66 = vld [vmem:[%s1 + $0x10c] sm:$0xff]
  %v67 = vld [vmem:[%s1 + $0x114] sm:$0xff]
  %v68 = vld [vmem:[%s1 + $0x11c] sm:$0xf]
  %v69 = vld [vmem:[%s1 + $0x120] sm:$0xff]
  %v70 = vld [vmem:[%s1 + $0x128] sm:$0xff]
  %v71 = vld [vmem:[%s1 + $0x130] sm:$0xff]
  %v72 = vld [vmem:[%s1 + $0x138] sm:$0xff]
  %v73 = vld [vmem:[%s1 + $0x140] sm:$0xf]
  %v74 = vld [vmem:[%s1 + $0x144] sm:$0xff]
  %v75 = vld [vmem:[%s1 + $0x14c] sm:$0xff]
  %v76 = vld [vmem:[%s1 + $0x154] sm:$0xff]
  %v77 = vld [vmem:[%s1 + $0x15c] sm:$0xff]
  %v78 = vld [vmem:[%s1 + $0x164] sm:$0xf]
  %v79 = vld [vmem:[%s1 + $0x168] sm:$0xff]
  %v80 = vld [vmem:[%s1 + $0x170] sm:$0xff]
  %v81 = vld [vmem:[%s1 + $0x178] sm:$0xff]
  %v82 = vld [vmem:[%s1 + $0x180] sm:$0xff]
  %v83 = vld [vmem:[%s1 + $0x188] sm:$0xf]
  %v84 = vld [vmem:[%s1 + $0x18c] sm:$0xff]
  %v85 = vld [vmem:[%s1 + $0x194] sm:$0xff]
  %v86 = vld [vmem:[%s1 + $0x19c] sm:$0xff]
  %v87 = vld [vmem:[%s1 + $0x1a4] sm:$0xff]
  %v88 = vld [vmem:[%s1 + $0x1ac] sm:$0xf]
  %v89 = vld [vmem:[%s1 + $0x1b0] sm:$0xff]
  %v90 = vld [vmem:[%s1 + $0x1b8] sm:$0xff]
  %v91 = vld [vmem:[%s1 + $0x1c0] sm:$0xff]
  %v92 = vld [vmem:[%s1 + $0x1c8] sm:$0xff]
  %v93 = vld [vmem:[%s1 + $0x1d0] sm:$0xf]
  %v94 = vld [vmem:[%s1 + $0x1d4] sm:$0xff]
  %v95 = vld [vmem:[%s1 + $0x1dc] sm:$0xff]
  %v96 = vld [vmem:[%s1 + $0x1e4] sm:$0xff]
  %v97 = vld [vmem:[%s1 + $0x1ec] sm:$0xff]
  %v98 = vld [vmem:[%s1 + $0x1f4] sm:$0xf]
  %v99 = vld [vmem:[%s1 + $0x1f8] sm:$0xff]
  %v100 = vld [vmem:[%s1 + $0x200] sm:$0xff]
  %v101 = vld [vmem:[%s1 + $0x208] sm:$0xff]
  %v102 = vld [vmem:[%s1 + $0x210] sm:$0xff]
  %v103 = vld [vmem:[%s1 + $0x218] sm:$0xf]
  %v104 = vld [vmem:[%s1 + $0x21c] sm:$0xff]
  %v105 = vld [vmem:[%s1 + $0x224] sm:$0xff]
  %v106 = vld [vmem:[%s1 + $0x22c] sm:$0xff]
  %v107 = vld [vmem:[%s1 + $0x234] sm:$0xff]
  %v108 = vld [vmem:[%s1 + $0x23c] sm:$0xf]
  %v109 = vld [vmem:[%s1 + $0x240] sm:$0xff]
  %v110 = vld [vmem:[%s1 + $0x248] sm:$0xff]
  %v111 = vld [vmem:[%s1 + $0x250] sm:$0xff]
  %v112 = vld [vmem:[%s1 + $0x258] sm:$0xff]
  %v113 = vld [vmem:[%s1 + $0x260] sm:$0xf]
  %v114 = vld [vmem:[%s1 + $0x264] sm:$0xff]
  %v115 = vld [vmem:[%s1 + $0x26c] sm:$0xff]
  %v116 = vld [vmem:[%s1 + $0x274] sm:$0xff]
  %v117 = vld [vmem:[%s1 + $0x27c] sm:$0xff]
  %v118 = vld [vmem:[%s1 + $0x284] sm:$0xf]
  %v119 = vld [vmem:[%s1 + $0x288] sm:$0xff]
  %v120 = vld [vmem:[%s1 + $0x290] sm:$0xff]
  %v121 = vld [vmem:[%s1 + $0x298] sm:$0xff]
  %v122 = vld [vmem:[%s1 + $0x2a0] sm:$0xff]
  %v123 = vld [vmem:[%s1 + $0x2a8] sm:$0xf]
  %v124 = vld [vmem:[%s1 + $0x2ac] sm:$0xff]
  %v125 = vld [vmem:[%s1 + $0x2b4] sm:$0xff]
  %v126 = vld [vmem:[%s1 + $0x2bc] sm:$0xff]
  %v127 = vld [vmem:[%s1 + $0x2c4] sm:$0xff]
  %v128 = vld [vmem:[%s1 + $0x2cc] sm:$0xf]
  %v129 = vld [vmem:[%s1 + $0x2d0] sm:$0xff]
  %v130 = vld [vmem:[%s1 + $0x2d8] sm:$0xff]
  %v131 = vld [vmem:[%s1 + $0x2e0] sm:$0xff]
  %v132 = vld [vmem:[%s1 + $0x2e8] sm:$0xff]
  %v133 = vld [vmem:[%s1 + $0x2f0] sm:$0xf]
  %v134 = vld [vmem:[%s1 + $0x2f4] sm:$0xff]
  %v135 = vld [vmem:[%s1 + $0x2fc] sm:$0xff]
  %v136 = vld [vmem:[%s1 + $0x304] sm:$0xff]
  %v137 = vld [vmem:[%s1 + $0x30c] sm:$0xff]
  %v138 = vld [vmem:[%s1 + $0x314] sm:$0xf]
  %v139 = vld [vmem:[%s1 + $0x318] sm:$0xff]
  %v140 = vld [vmem:[%s1 + $0x320] sm:$0xff]
  %v141 = vld [vmem:[%s1 + $0x328] sm:$0xff]
  %v142 = vld [vmem:[%s1 + $0x330] sm:$0xff]
  %v143 = vld [vmem:[%s1 + $0x338] sm:$0xf]
  %v144 = vld [vmem:[%s1 + $0x33c] sm:$0xff]
  %v145 = vld [vmem:[%s1 + $0x344] sm:$0xff]
  %v146 = vld [vmem:[%s1 + $0x34c] sm:$0xff]
  %v147 = vld [vmem:[%s1 + $0x354] sm:$0xff]
  %v148 = vld [vmem:[%s1 + $0x35c] sm:$0xf]
  %v149 = vld [vmem:[%s1 + $0x360] sm:$0xff]
  %v150 = vld [vmem:[%s1 + $0x368] sm:$0xff]
  %v151 = vld [vmem:[%s1 + $0x370] sm:$0xff]
  %v152 = vld [vmem:[%s1 + $0x378] sm:$0xff]
  %v153 = vld [vmem:[%s1 + $0x380] sm:$0xf]
  %v156 = vunpack.c.l.b16 %v27
  %v157 = vunpack.c.h.b16 %v27
  %v158 = vunpack.c.l.b16 %v28
  %v159 = vunpack.c.h.b16 %v28
  %v160 = vpack.c.b16 %v158, %v156
  %v161 = vpack.c.b16 %v159, %v157
  %v288 = vunpack.c.l.b16 %v29
  %v289 = vunpack.c.h.b16 %v29
  %v290 = vunpack.c.l.b16 %v30
  %v291 = vunpack.c.h.b16 %v30
  %v292 = vunpack.c.l.b16 %v31
  %v293 = vunpack.c.h.b16 %v31
  %v294 = vunpack.c.l.b16 %v32
  %v295 = vunpack.c.h.b16 %v32
  %v296 = vunpack.c.l.b16 %v33
  %v297 = vunpack.c.l.b16 %v34
  %v298 = vunpack.c.h.b16 %v34
  %v299 = vunpack.c.l.b16 %v35
  %v300 = vunpack.c.h.b16 %v35
  %v301 = vunpack.c.l.b16 %v36
  %v302 = vunpack.c.h.b16 %v36
  %v303 = vunpack.c.l.b16 %v37
  %v304 = vunpack.c.h.b16 %v37
  %v305 = vunpack.c.l.b16 %v38
  %v306 = vunpack.c.l.b16 %v39
  %v307 = vunpack.c.h.b16 %v39
  %v308 = vunpack.c.l.b16 %v40
  %v309 = vunpack.c.h.b16 %v40
  %v310 = vunpack.c.l.b16 %v41
  %v311 = vunpack.c.h.b16 %v41
  %v312 = vunpack.c.l.b16 %v42
  %v313 = vunpack.c.h.b16 %v42
  %v314 = vunpack.c.l.b16 %v43
  %v315 = vunpack.c.l.b16 %v44
  %v316 = vunpack.c.h.b16 %v44
  %v317 = vunpack.c.l.b16 %v45
  %v318 = vunpack.c.h.b16 %v45
  %v319 = vunpack.c.l.b16 %v46
  %v320 = vunpack.c.h.b16 %v46
  %v321 = vunpack.c.l.b16 %v47
  %v322 = vunpack.c.h.b16 %v47
  %v323 = vunpack.c.l.b16 %v48
  %v324 = vunpack.c.l.b16 %v49
  %v325 = vunpack.c.h.b16 %v49
  %v326 = vunpack.c.l.b16 %v50
  %v327 = vunpack.c.h.b16 %v50
  %v328 = vunpack.c.l.b16 %v51
  %v329 = vunpack.c.h.b16 %v51
  %v330 = vunpack.c.l.b16 %v52
  %v331 = vunpack.c.h.b16 %v52
  %v332 = vunpack.c.l.b16 %v53
  %v333 = vunpack.c.l.b16 %v54
  %v334 = vunpack.c.h.b16 %v54
  %v335 = vunpack.c.l.b16 %v55
  %v336 = vunpack.c.h.b16 %v55
  %v337 = vunpack.c.l.b16 %v56
  %v338 = vunpack.c.h.b16 %v56
  %v339 = vunpack.c.l.b16 %v57
  %v340 = vunpack.c.h.b16 %v57
  %v341 = vunpack.c.l.b16 %v58
  %v342 = vunpack.c.l.b16 %v59
  %v343 = vunpack.c.h.b16 %v59
  %v344 = vunpack.c.l.b16 %v60
  %v345 = vunpack.c.h.b16 %v60
  %v346 = vunpack.c.l.b16 %v61
  %v347 = vunpack.c.h.b16 %v61
  %v348 = vunpack.c.l.b16 %v62
  %v349 = vunpack.c.h.b16 %v62
  %v350 = vunpack.c.l.b16 %v63
  %v351 = vunpack.c.l.b16 %v64
  %v352 = vunpack.c.h.b16 %v64
  %v353 = vunpack.c.l.b16 %v65
  %v354 = vunpack.c.h.b16 %v65
  %v355 = vunpack.c.l.b16 %v66
  %v356 = vunpack.c.h.b16 %v66
  %v357 = vunpack.c.l.b16 %v67
  %v358 = vunpack.c.h.b16 %v67
  %v359 = vunpack.c.l.b16 %v68
  %v360 = vunpack.c.l.b16 %v69
  %v361 = vunpack.c.h.b16 %v69
  %v362 = vunpack.c.l.b16 %v70
  %v363 = vunpack.c.h.b16 %v70
  %v364 = vunpack.c.l.b16 %v71
  %v365 = vunpack.c.h.b16 %v71
  %v366 = vunpack.c.l.b16 %v72
  %v367 = vunpack.c.h.b16 %v72
  %v368 = vunpack.c.l.b16 %v73
  %v369 = vunpack.c.l.b16 %v74
  %v370 = vunpack.c.h.b16 %v74
  %v371 = vunpack.c.l.b16 %v75
  %v372 = vunpack.c.h.b16 %v75
  %v373 = vunpack.c.l.b16 %v76
  %v374 = vunpack.c.h.b16 %v76
  %v375 = vunpack.c.l.b16 %v77
  %v376 = vunpack.c.h.b16 %v77
  %v377 = vunpack.c.l.b16 %v78
  %v378 = vunpack.c.l.b16 %v79
  %v379 = vunpack.c.h.b16 %v79
  %v380 = vunpack.c.l.b16 %v80
  %v381 = vunpack.c.h.b16 %v80
  %v382 = vunpack.c.l.b16 %v81
  %v383 = vunpack.c.h.b16 %v81
  %v384 = vunpack.c.l.b16 %v82
  %v385 = vunpack.c.h.b16 %v82
  %v386 = vunpack.c.l.b16 %v83
  %v387 = vunpack.c.l.b16 %v84
  %v388 = vunpack.c.h.b16 %v84
  %v389 = vunpack.c.l.b16 %v85
  %v390 = vunpack.c.h.b16 %v85
  %v391 = vunpack.c.l.b16 %v86
  %v392 = vunpack.c.h.b16 %v86
  %v393 = vunpack.c.l.b16 %v87
  %v394 = vunpack.c.h.b16 %v87
  %v395 = vunpack.c.l.b16 %v88
  %v396 = vunpack.c.l.b16 %v89
  %v397 = vunpack.c.h.b16 %v89
  %v398 = vunpack.c.l.b16 %v90
  %v399 = vunpack.c.h.b16 %v90
  %v400 = vunpack.c.l.b16 %v91
  %v401 = vunpack.c.h.b16 %v91
  %v402 = vunpack.c.l.b16 %v92
  %v403 = vunpack.c.h.b16 %v92
  %v404 = vunpack.c.l.b16 %v93
  %v405 = vunpack.c.l.b16 %v94
  %v406 = vunpack.c.h.b16 %v94
  %v407 = vunpack.c.l.b16 %v95
  %v408 = vunpack.c.h.b16 %v95
  %v409 = vunpack.c.l.b16 %v96
  %v410 = vunpack.c.h.b16 %v96
  %v411 = vunpack.c.l.b16 %v97
  %v412 = vunpack.c.h.b16 %v97
  %v413 = vunpack.c.l.b16 %v98
  %v414 = vunpack.c.l.b16 %v99
  %v415 = vunpack.c.h.b16 %v99
  %v416 = vunpack.c.l.b16 %v100
  %v417 = vunpack.c.h.b16 %v100
  %v418 = vunpack.c.l.b16 %v101
  %v419 = vunpack.c.h.b16 %v101
  %v420 = vunpack.c.l.b16 %v102
  %v421 = vunpack.c.h.b16 %v102
  %v422 = vunpack.c.l.b16 %v103
  %v423 = vunpack.c.l.b16 %v104
  %v424 = vunpack.c.h.b16 %v104
  %v425 = vunpack.c.l.b16 %v105
  %v426 = vunpack.c.h.b16 %v105
  %v427 = vunpack.c.l.b16 %v106
  %v428 = vunpack.c.h.b16 %v106
  %v429 = vunpack.c.l.b16 %v107
  %v430 = vunpack.c.h.b16 %v107
  %v431 = vunpack.c.l.b16 %v108
  %v432 = vunpack.c.l.b16 %v109
  %v433 = vunpack.c.h.b16 %v109
  %v434 = vunpack.c.l.b16 %v110
  %v435 = vunpack.c.h.b16 %v110
  %v436 = vunpack.c.l.b16 %v111
  %v437 = vunpack.c.h.b16 %v111
  %v438 = vunpack.c.l.b16 %v112
  %v439 = vunpack.c.h.b16 %v112
  %v440 = vunpack.c.l.b16 %v113
  %v441 = vunpack.c.l.b16 %v114
  %v442 = vunpack.c.h.b16 %v114
  %v443 = vunpack.c.l.b16 %v115
  %v444 = vunpack.c.h.b16 %v115
  %v445 = vunpack.c.l.b16 %v116
  %v446 = vunpack.c.h.b16 %v116
  %v447 = vunpack.c.l.b16 %v117
  %v448 = vunpack.c.h.b16 %v117
  %v449 = vunpack.c.l.b16 %v118
  %v450 = vunpack.c.l.b16 %v119
  %v451 = vunpack.c.h.b16 %v119
  %v452 = vunpack.c.l.b16 %v120
  %v453 = vunpack.c.h.b16 %v120
  %v454 = vunpack.c.l.b16 %v121
  %v455 = vunpack.c.h.b16 %v121
  %v456 = vunpack.c.l.b16 %v122
  %v457 = vunpack.c.h.b16 %v122
  %v458 = vunpack.c.l.b16 %v123
  %v459 = vunpack.c.l.b16 %v124
  %v460 = vunpack.c.h.b16 %v124
  %v461 = vunpack.c.l.b16 %v125
  %v462 = vunpack.c.h.b16 %v125
  %v463 = vunpack.c.l.b16 %v126
  %v464 = vunpack.c.h.b16 %v126
  %v465 = vunpack.c.l.b16 %v127
  %v466 = vunpack.c.h.b16 %v127
  %v467 = vunpack.c.l.b16 %v128
  %v468 = vunpack.c.l.b16 %v129
  %v469 = vunpack.c.h.b16 %v129
  %v470 = vunpack.c.l.b16 %v130
  %v471 = vunpack.c.h.b16 %v130
  %v472 = vunpack.c.l.b16 %v131
  %v473 = vunpack.c.h.b16 %v131
  %v474 = vunpack.c.l.b16 %v132
  %v475 = vunpack.c.h.b16 %v132
  %v476 = vunpack.c.l.b16 %v133
  %v477 = vunpack.c.l.b16 %v134
  %v478 = vunpack.c.h.b16 %v134
  %v479 = vunpack.c.l.b16 %v135
  %v480 = vunpack.c.h.b16 %v135
  %v481 = vunpack.c.l.b16 %v136
  %v482 = vunpack.c.h.b16 %v136
  %v483 = vunpack.c.l.b16 %v137
  %v484 = vunpack.c.h.b16 %v137
  %v485 = vunpack.c.l.b16 %v138
  %v486 = vunpack.c.l.b16 %v139
  %v487 = vunpack.c.h.b16 %v139
  %v488 = vunpack.c.l.b16 %v140
  %v489 = vunpack.c.h.b16 %v140
  %v490 = vunpack.c.l.b16 %v141
  %v491 = vunpack.c.h.b16 %v141
  %v492 = vunpack.c.l.b16 %v142
  %v493 = vunpack.c.h.b16 %v142
  %v494 = vunpack.c.l.b16 %v143
  %v495 = vunpack.c.l.b16 %v144
  %v496 = vunpack.c.h.b16 %v144
  %v497 = vunpack.c.l.b16 %v145
  %v498 = vunpack.c.h.b16 %v145
  %v499 = vunpack.c.l.b16 %v146
  %v500 = vunpack.c.h.b16 %v146
  %v501 = vunpack.c.l.b16 %v147
  %v502 = vunpack.c.h.b16 %v147
  %v503 = vunpack.c.l.b16 %v148
  %v504 = vunpack.c.l.b16 %v149
  %v505 = vunpack.c.h.b16 %v149
  %v506 = vunpack.c.l.b16 %v150
  %v507 = vunpack.c.h.b16 %v150
  %v508 = vunpack.c.l.b16 %v151
  %v509 = vunpack.c.h.b16 %v151
  %v510 = vunpack.c.l.b16 %v152
  %v511 = vunpack.c.h.b16 %v152
  %v512 = vunpack.c.l.b16 %v153
  %v513 = vpack.c.b16 %v297, %v288
  %v514 = vpack.c.b16 %v298, %v289
  %v515 = vpack.c.b16 %v299, %v290
  %v516 = vpack.c.b16 %v300, %v291
  %v517 = vpack.c.b16 %v301, %v292
  %v518 = vpack.c.b16 %v302, %v293
  %v519 = vpack.c.b16 %v303, %v294
  %v520 = vpack.c.b16 %v304, %v295
  %v521 = vpack.c.b16 %v305, %v296
  %v522 = vpack.c.b16 %v315, %v306
  %v523 = vpack.c.b16 %v316, %v307
  %v524 = vpack.c.b16 %v317, %v308
  %v525 = vpack.c.b16 %v318, %v309
  %v526 = vpack.c.b16 %v319, %v310
  %v527 = vpack.c.b16 %v320, %v311
  %v528 = vpack.c.b16 %v321, %v312
  %v529 = vpack.c.b16 %v322, %v313
  %v530 = vpack.c.b16 %v323, %v314
  %v531 = vpack.c.b16 %v333, %v324
  %v532 = vpack.c.b16 %v334, %v325
  %v533 = vpack.c.b16 %v335, %v326
  %v534 = vpack.c.b16 %v336, %v327
  %v535 = vpack.c.b16 %v337, %v328
  %v536 = vpack.c.b16 %v338, %v329
  %v537 = vpack.c.b16 %v339, %v330
  %v538 = vpack.c.b16 %v340, %v331
  %v539 = vpack.c.b16 %v341, %v332
  %v540 = vpack.c.b16 %v351, %v342
  %v541 = vpack.c.b16 %v352, %v343
  %v542 = vpack.c.b16 %v353, %v344
  %v543 = vpack.c.b16 %v354, %v345
  %v544 = vpack.c.b16 %v355, %v346
  %v545 = vpack.c.b16 %v356, %v347
  %v546 = vpack.c.b16 %v357, %v348
  %v547 = vpack.c.b16 %v358, %v349
  %v548 = vpack.c.b16 %v359, %v350
  %v549 = vpack.c.b16 %v369, %v360
  %v550 = vpack.c.b16 %v370, %v361
  %v551 = vpack.c.b16 %v371, %v362
  %v552 = vpack.c.b16 %v372, %v363
  %v553 = vpack.c.b16 %v373, %v364
  %v554 = vpack.c.b16 %v374, %v365
  %v555 = vpack.c.b16 %v375, %v366
  %v556 = vpack.c.b16 %v376, %v367
  %v557 = vpack.c.b16 %v377, %v368
  %v558 = vpack.c.b16 %v387, %v378
  %v559 = vpack.c.b16 %v388, %v379
  %v560 = vpack.c.b16 %v389, %v380
  %v561 = vpack.c.b16 %v390, %v381
  %v562 = vpack.c.b16 %v391, %v382
  %v563 = vpack.c.b16 %v392, %v383
  %v564 = vpack.c.b16 %v393, %v384
  %v565 = vpack.c.b16 %v394, %v385
  %v566 = vpack.c.b16 %v395, %v386
  %v567 = vpack.c.b16 %v405, %v396
  %v568 = vpack.c.b16 %v406, %v397
  %v569 = vpack.c.b16 %v407, %v398
  %v570 = vpack.c.b16 %v408, %v399
  %v571 = vpack.c.b16 %v409, %v400
  %v572 = vpack.c.b16 %v410, %v401
  %v573 = vpack.c.b16 %v411, %v402
  %v574 = vpack.c.b16 %v412, %v403
  %v575 = vpack.c.b16 %v413, %v404
  %v576 = vpack.c.b16 %v423, %v414
  %v577 = vpack.c.b16 %v424, %v415
  %v578 = vpack.c.b16 %v425, %v416
  %v579 = vpack.c.b16 %v426, %v417
  %v580 = vpack.c.b16 %v427, %v418
  %v581 = vpack.c.b16 %v428, %v419
  %v582 = vpack.c.b16 %v429, %v420
  %v583 = vpack.c.b16 %v430, %v421
  %v584 = vpack.c.b16 %v431, %v422
  %v585 = vpack.c.b16 %v441, %v432
  %v586 = vpack.c.b16 %v442, %v433
  %v587 = vpack.c.b16 %v443, %v434
  %v588 = vpack.c.b16 %v444, %v435
  %v589 = vpack.c.b16 %v445, %v436
  %v590 = vpack.c.b16 %v446, %v437
  %v591 = vpack.c.b16 %v447, %v438
  %v592 = vpack.c.b16 %v448, %v439
  %v593 = vpack.c.b16 %v449, %v440
  %v594 = vpack.c.b16 %v459, %v450
  %v595 = vpack.c.b16 %v460, %v451
  %v596 = vpack.c.b16 %v461, %v452
  %v597 = vpack.c.b16 %v462, %v453
  %v598 = vpack.c.b16 %v463, %v454
  %v599 = vpack.c.b16 %v464, %v455
  %v600 = vpack.c.b16 %v465, %v456
  %v601 = vpack.c.b16 %v466, %v457
  %v602 = vpack.c.b16 %v467, %v458
  %v603 = vpack.c.b16 %v477, %v468
  %v604 = vpack.c.b16 %v478, %v469
  %v605 = vpack.c.b16 %v479, %v470
  %v606 = vpack.c.b16 %v480, %v471
  %v607 = vpack.c.b16 %v481, %v472
  %v608 = vpack.c.b16 %v482, %v473
  %v609 = vpack.c.b16 %v483, %v474
  %v610 = vpack.c.b16 %v484, %v475
  %v611 = vpack.c.b16 %v485, %v476
  %v612 = vpack.c.b16 %v495, %v486
  %v613 = vpack.c.b16 %v496, %v487
  %v614 = vpack.c.b16 %v497, %v488
  %v615 = vpack.c.b16 %v498, %v489
  %v616 = vpack.c.b16 %v499, %v490
  %v617 = vpack.c.b16 %v500, %v491
  %v618 = vpack.c.b16 %v501, %v492
  %v619 = vpack.c.b16 %v502, %v493
  %v620 = vpack.c.b16 %v503, %v494
  %v621 = vpack.c.b16 %v504, %v504
  %v622 = vpack.c.b16 %v505, %v505
  %v623 = vpack.c.b16 %v506, %v506
  %v624 = vpack.c.b16 %v507, %v507
  %v625 = vpack.c.b16 %v508, %v508
  %v626 = vpack.c.b16 %v509, %v509
  %v627 = vpack.c.b16 %v510, %v510
  %v628 = vpack.c.b16 %v511, %v511
  %v629 = vpack.c.b16 %v512, %v512
  %vm738 = vcmask 588800
  %v740 = vsel %vm738, %v161, 0
  %vm742 = vcmask 1043456
  %v744 = vsel %vm742, %v621, 0
  %v747 = vsel %vm742, %v622, 0
  %v750 = vsel %vm742, %v623, 0
  %v753 = vsel %vm742, %v624, 0
  %v756 = vsel %vm742, %v625, 0
  %v759 = vsel %vm742, %v626, 0
  %v762 = vsel %vm742, %v627, 0
  %v765 = vsel %vm742, %v628, 0
  %v768 = vsel %vm742, %v629, 0
  %770 = vmatprep.subr.bf16.mxu0 %v514
  %771 = vmatpush1.bf16.msra.mxu0 %v513
  %772 = vmatprep.subr.bf16.mxu0 %v523
  %773 = vmatpush1.bf16.msra.mxu0 %v522
  %774 = vmatprep.subr.bf16.mxu0 %v532
  %775 = vmatpush1.bf16.msra.mxu0 %v531
  %776 = vmatprep.subr.bf16.mxu0 %v541
  %777 = vmatpush1.bf16.msra.mxu0 %v540
  %778 = vmatprep.subr.bf16.mxu0 %v550
  %779 = vmatpush1.bf16.msra.mxu0 %v549
  %780 = vmatprep.subr.bf16.mxu0 %v559
  %781 = vmatpush1.bf16.msra.mxu0 %v558
  %782 = vmatprep.subr.bf16.mxu0 %v568
  %783 = vmatpush1.bf16.msra.mxu0 %v567
  %784 = vmatprep.subr.bf16.mxu0 %v577
  %785 = vmatpush1.bf16.msra.mxu0 %v576
  %786 = vmatprep.subr.bf16.mxu0 %v586
  %787 = vmatpush1.bf16.msra.mxu0 %v585
  %788 = vmatprep.subr.bf16.mxu0 %v595
  %789 = vmatpush1.bf16.msra.mxu0 %v594
  %790 = vmatprep.subr.bf16.mxu0 %v604
  %791 = vmatpush1.bf16.msra.mxu0 %v603
  %792 = vmatprep.subr.bf16.mxu0 %v613
  %793 = vmatpush1.bf16.msra.mxu0 %v612
  %794 = vmatprep.subr.bf16.mxu0 %v747
  %795 = vmatpush1.bf16.msra.mxu0 %v744
  %796 = vmatprep.subr.bf16.mxu0 0
  %797 = vmatpush1.bf16.msra.mxu0 0
  %798 = vmatprep.subr.bf16.mxu0 0
  %799 = vmatpush1.bf16.msra.mxu0 0
  %800 = vmatprep.subr.bf16.mxu0 0
  %801 = vmatpush1.bf16.msra.mxu0 0
  %802 = vmatprep.mubr.bf16.mxu0 %v740
  %803 = vmatmul.mubr.bf16.gmra.mrb[0].mxu0 %v160
  %v804 = vpop.f32.mrb[0].mxu0
  %v805 = vadd.f32 0.0, %v804
  %v806 = vpop.f32.mrb[0].mxu0
  %v807 = vadd.f32 0.0, %v806
  %v808 = vpop.f32.mrb[0].mxu0
  %v809 = vadd.f32 0.0, %v808
  %v810 = vpop.f32.mrb[0].mxu0
  %v811 = vadd.f32 0.0, %v810
  %812 = vdwg.mxu0
  %813 = vmatprep.subr.bf16.mxu0 %v516
  %814 = vmatpush1.bf16.msra.mxu0 %v515
  %815 = vmatprep.subr.bf16.mxu0 %v525
  %816 = vmatpush1.bf16.msra.mxu0 %v524
  %817 = vmatprep.subr.bf16.mxu0 %v534
  %818 = vmatpush1.bf16.msra.mxu0 %v533
  %819 = vmatprep.subr.bf16.mxu0 %v543
  %820 = vmatpush1.bf16.msra.mxu0 %v542
  %821 = vmatprep.subr.bf16.mxu0 %v552
  %822 = vmatpush1.bf16.msra.mxu0 %v551
  %823 = vmatprep.subr.bf16.mxu0 %v561
  %824 = vmatpush1.bf16.msra.mxu0 %v560
  %825 = vmatprep.subr.bf16.mxu0 %v570
  %826 = vmatpush1.bf16.msra.mxu0 %v569
  %827 = vmatprep.subr.bf16.mxu0 %v579
  %828 = vmatpush1.bf16.msra.mxu0 %v578
  %829 = vmatprep.subr.bf16.mxu0 %v588
  %830 = vmatpush1.bf16.msra.mxu0 %v587
  %831 = vmatprep.subr.bf16.mxu0 %v597
  %832 = vmatpush1.bf16.msra.mxu0 %v596
  %833 = vmatprep.subr.bf16.mxu0 %v606
  %834 = vmatpush1.bf16.msra.mxu0 %v605
  %835 = vmatprep.subr.bf16.mxu0 %v615
  %836 = vmatpush1.bf16.msra.mxu0 %v614
  %837 = vmatprep.subr.bf16.mxu0 %v753
  %838 = vmatpush1.bf16.msra.mxu0 %v750
  %839 = vmatprep.subr.bf16.mxu0 0
  %840 = vmatpush1.bf16.msra.mxu0 0
  %841 = vmatprep.subr.bf16.mxu0 0
  %842 = vmatpush1.bf16.msra.mxu0 0
  %843 = vmatprep.subr.bf16.mxu0 0
  %844 = vmatpush1.bf16.msra.mxu0 0
  %845 = vmatprep.mubr.bf16.mxu0 %v740
  %846 = vmatmul.mubr.bf16.gmra.mrb[0].mxu0 %v160
  %v847 = vpop.f32.mrb[0].mxu0
  %v848 = vadd.f32 0.0, %v847
  %v849 = vpop.f32.mrb[0].mxu0
  %v850 = vadd.f32 0.0, %v849
  %v851 = vpop.f32.mrb[0].mxu0
  %v852 = vadd.f32 0.0, %v851
  %v853 = vpop.f32.mrb[0].mxu0
  %v854 = vadd.f32 0.0, %v853
  %855 = vdwg.mxu0
  %856 = vmatprep.subr.bf16.mxu0 %v518
  %857 = vmatpush1.bf16.msra.mxu0 %v517
  %858 = vmatprep.subr.bf16.mxu0 %v527
  %859 = vmatpush1.bf16.msra.mxu0 %v526
  %860 = vmatprep.subr.bf16.mxu0 %v536
  %861 = vmatpush1.bf16.msra.mxu0 %v535
  %862 = vmatprep.subr.bf16.mxu0 %v545
  %863 = vmatpush1.bf16.msra.mxu0 %v544
  %864 = vmatprep.subr.bf16.mxu0 %v554
  %865 = vmatpush1.bf16.msra.mxu0 %v553
  %866 = vmatprep.subr.bf16.mxu0 %v563
  %867 = vmatpush1.bf16.msra.mxu0 %v562
  %868 = vmatprep.subr.bf16.mxu0 %v572
  %869 = vmatpush1.bf16.msra.mxu0 %v571
  %870 = vmatprep.subr.bf16.mxu0 %v581
  %871 = vmatpush1.bf16.msra.mxu0 %v580
  %872 = vmatprep.subr.bf16.mxu0 %v590
  %873 = vmatpush1.bf16.msra.mxu0 %v589
  %874 = vmatprep.subr.bf16.mxu0 %v599
  %875 = vmatpush1.bf16.msra.mxu0 %v598
  %876 = vmatprep.subr.bf16.mxu0 %v608
  %877 = vmatpush1.bf16.msra.mxu0 %v607
  %878 = vmatprep.subr.bf16.mxu0 %v617
  %879 = vmatpush1.bf16.msra.mxu0 %v616
  %880 = vmatprep.subr.bf16.mxu0 %v759
  %881 = vmatpush1.bf16.msra.mxu0 %v756
  %882 = vmatprep.subr.bf16.mxu0 0
  %883 = vmatpush1.bf16.msra.mxu0 0
  %884 = vmatprep.subr.bf16.mxu0 0
  %885 = vmatpush1.bf16.msra.mxu0 0
  %886 = vmatprep.subr.bf16.mxu0 0
  %887 = vmatpush1.bf16.msra.mxu0 0
  %888 = vmatprep.mubr.bf16.mxu0 %v740
  %889 = vmatmul.mubr.bf16.gmra.mrb[0].mxu0 %v160
  %v890 = vpop.f32.mrb[0].mxu0
  %v891 = vadd.f32 0.0, %v890
  %v892 = vpop.f32.mrb[0].mxu0
  %v893 = vadd.f32 0.0, %v892
  %v894 = vpop.f32.mrb[0].mxu0
  %v895 = vadd.f32 0.0, %v894
  %v896 = vpop.f32.mrb[0].mxu0
  %v897 = vadd.f32 0.0, %v896
  %898 = vdwg.mxu0
  %899 = vmatprep.subr.bf16.mxu0 %v520
  %900 = vmatpush1.bf16.msra.mxu0 %v519
  %901 = vmatprep.subr.bf16.mxu0 %v529
  %902 = vmatpush1.bf16.msra.mxu0 %v528
  %903 = vmatprep.subr.bf16.mxu0 %v538
  %904 = vmatpush1.bf16.msra.mxu0 %v537
  %905 = vmatprep.subr.bf16.mxu0 %v547
  %906 = vmatpush1.bf16.msra.mxu0 %v546
  %907 = vmatprep.subr.bf16.mxu0 %v556
  %908 = vmatpush1.bf16.msra.mxu0 %v555
  %909 = vmatprep.subr.bf16.mxu0 %v565
  %910 = vmatpush1.bf16.msra.mxu0 %v564
  %911 = vmatprep.subr.bf16.mxu0 %v574
  %912 = vmatpush1.bf16.msra.mxu0 %v573
  %913 = vmatprep.subr.bf16.mxu0 %v583
  %914 = vmatpush1.bf16.msra.mxu0 %v582
  %915 = vmatprep.subr.bf16.mxu0 %v592
  %916 = vmatpush1.bf16.msra.mxu0 %v591
  %917 = vmatprep.subr.bf16.mxu0 %v601
  %918 = vmatpush1.bf16.msra.mxu0 %v600
  %919 = vmatprep.subr.bf16.mxu0 %v610
  %920 = vmatpush1.bf16.msra.mxu0 %v609
  %921 = vmatprep.subr.bf16.mxu0 %v619
  %922 = vmatpush1.bf16.msra.mxu0 %v618
  %923 = vmatprep.subr.bf16.mxu0 %v765
  %924 = vmatpush1.bf16.msra.mxu0 %v762
  %925 = vmatprep.subr.bf16.mxu0 0
  %926 = vmatpush1.bf16.msra.mxu0 0
  %927 = vmatprep.subr.bf16.mxu0 0
  %928 = vmatpush1.bf16.msra.mxu0 0
  %929 = vmatprep.subr.bf16.mxu0 0
  %930 = vmatpush1.bf16.msra.mxu0 0
  %931 = vmatprep.mubr.bf16.mxu0 %v740
  %932 = vmatmul.mubr.bf16.gmra.mrb[0].mxu0 %v160
  %v933 = vpop.f32.mrb[0].mxu0
  %v934 = vadd.f32 0.0, %v933
  %v935 = vpop.f32.mrb[0].mxu0
  %v936 = vadd.f32 0.0, %v935
  %v937 = vpop.f32.mrb[0].mxu0
  %v938 = vadd.f32 0.0, %v937
  %v939 = vpop.f32.mrb[0].mxu0
  %v940 = vadd.f32 0.0, %v939
  %941 = vdwg.mxu0
  %942 = vmatprep.subr.bf16.mxu0 0
  %943 = vmatpush1.bf16.msra.mxu0 %v521
  %944 = vmatprep.subr.bf16.mxu0 0
  %945 = vmatpush1.bf16.msra.mxu0 %v530
  %946 = vmatprep.subr.bf16.mxu0 0
  %947 = vmatpush1.bf16.msra.mxu0 %v539
  %948 = vmatprep.subr.bf16.mxu0 0
  %949 = vmatpush1.bf16.msra.mxu0 %v548
  %950 = vmatprep.subr.bf16.mxu0 0
  %951 = vmatpush1.bf16.msra.mxu0 %v557
  %952 = vmatprep.subr.bf16.mxu0 0
  %953 = vmatpush1.bf16.msra.mxu0 %v566
  %954 = vmatprep.subr.bf16.mxu0 0
  %955 = vmatpush1.bf16.msra.mxu0 %v575
  %956 = vmatprep.subr.bf16.mxu0 0
  %957 = vmatpush1.bf16.msra.mxu0 %v584
  %958 = vmatprep.subr.bf16.mxu0 0
  %959 = vmatpush1.bf16.msra.mxu0 %v593
  %960 = vmatprep.subr.bf16.mxu0 0
  %961 = vmatpush1.bf16.msra.mxu0 %v602
  %962 = vmatprep.subr.bf16.mxu0 0
  %963 = vmatpush1.bf16.msra.mxu0 %v611
  %964 = vmatprep.subr.bf16.mxu0 0
  %965 = vmatpush1.bf16.msra.mxu0 %v620
  %966 = vmatprep.subr.bf16.mxu0 0
  %967 = vmatpush1.bf16.msra.mxu0 %v768
  %968 = vmatprep.subr.bf16.mxu0 0
  %969 = vmatpush1.bf16.msra.mxu0 0
  %970 = vmatprep.subr.bf16.mxu0 0
  %971 = vmatpush1.bf16.msra.mxu0 0
  %972 = vmatprep.subr.bf16.mxu0 0
  %973 = vmatpush1.bf16.msra.mxu0 0
  %974 = vmatprep.mubr.bf16.mxu0 %v740
  %975 = vmatmul.mubr.bf16.gmra.mrb[0].mxu0 %v160
  %v976 = vpop.f32.mrb[0].mxu0
  %v977 = vadd.f32 0.0, %v976
  %v978 = vpop.f32.mrb[0].mxu0
  %v979 = vpop.f32.mrb[0].mxu0
  %v980 = vadd.f32 0.0, %v979
  %v981 = vpop.f32.mrb[0].mxu0
  %982 = vdwg.mxu0
  %v983 = vmax.f32 %v805, %v850
  %v984 = vmax.f32 %v807, %v891
  %v985 = vmax.f32 %v848, %v893
  %v986 = vmax.f32 %v809, %v854
  %v987 = vmax.f32 %v811, %v895
  %v988 = vmax.f32 %v852, %v897
  %v989 = vmax.f32 %v983, %v934
  %v990 = vmax.f32 %v984, %v936
  %v991 = vmax.f32 %v985, %v977
  %v992 = vmax.f32 %v986, %v938
  %v993 = vmax.f32 %v987, %v940
  %v994 = vmax.f32 %v988, %v980
  %v995 = vld [vmem:[%s2] sm:$0x7]
  %v997 = vlaneseq
  %v998 = vshrl.u32 %v997, 7
  %v999 = vsub.s32 0, %v998
  %v1000 = vrot.slane %v995, %v999
  %v1001 = vlaneseq
  %v1002 = vshrl.u32 %v1001, 7
  %v1003 = vsub.s32 1, %v1002
  %v1004 = vrot.slane %v995, %v1003
  %v1005 = vlaneseq
  %v1006 = vshrl.u32 %v1005, 7
  %v1007 = vsub.s32 2, %v1006
  %v1008 = vrot.slane %v995, %v1007
  %v1012 = vadd.f32 %v989, %v1000
  %v1013 = vadd.f32 %v990, %v1004
  %v1014 = vadd.f32 %v991, %v1008
  %v1015 = vadd.f32 %v992, %v1000
  %v1016 = vadd.f32 %v993, %v1004
  %v1017 = vadd.f32 %v994, %v1008
  %v1018 = vmax.f32 %v1012, 0.0
  %v1019 = vmax.f32 %v1013, 0.0
  %v1020 = vmax.f32 %v1014, 0.0
  %v1021 = vmax.f32 %v1015, 0.0
  %v1022 = vmax.f32 %v1016, 0.0
  %v1023 = vmax.f32 %v1017, 0.0
  %v1024 = vpack.c.bf16 %v1021, %v1018
  %v1025 = vpack.c.bf16 %v1022, %v1019
  %v1026 = vpack.c.bf16 %v1023, %v1020
  %v1027 = vld [vmem:[%s3] sm:$0xff]
  %v1028 = vld [vmem:[%s3 + $0x8] sm:$0xff]
  %v1029 = vld [vmem:[%s3 + $0x10] sm:$0xff]
  %v1030 = vld [vmem:[%s3 + $0x18] sm:$0xff]
  %v1031 = vld [vmem:[%s3 + $0x20] sm:$0xff]
  %v1032 = vld [vmem:[%s3 + $0x28] sm:$0xff]
  %v1033 = vld [vmem:[%s3 + $0x30] sm:$0xff]
  %v1034 = vld [vmem:[%s3 + $0x38] sm:$0xff]
  %v1035 = vld [vmem:[%s3 + $0x40] sm:$0xff]
  %v1036 = vld [vmem:[%s3 + $0x48] sm:$0xff]
  %v1037 = vld [vmem:[%s3 + $0x50] sm:$0xff]
  %v1038 = vld [vmem:[%s3 + $0x58] sm:$0xff]
  %v1039 = vld [vmem:[%s3 + $0x60] sm:$0xff]
  %v1040 = vld [vmem:[%s3 + $0x68] sm:$0xff]
  %v1041 = vld [vmem:[%s3 + $0x70] sm:$0xff]
  %v1042 = vld [vmem:[%s3 + $0x78] sm:$0xff]
  %v1043 = vld [vmem:[%s3 + $0x80] sm:$0xff]
  %v1044 = vld [vmem:[%s3 + $0x88] sm:$0xff]
  %v1045 = vld [vmem:[%s3 + $0x90] sm:$0xff]
  %v1046 = vld [vmem:[%s3 + $0x98] sm:$0xff]
  %v1047 = vld [vmem:[%s3 + $0xa0] sm:$0xff]
  %v1048 = vld [vmem:[%s3 + $0xa8] sm:$0xff]
  %v1049 = vld [vmem:[%s3 + $0xb0] sm:$0xff]
  %v1050 = vld [vmem:[%s3 + $0xb8] sm:$0xff]
  %v1051 = vld [vmem:[%s3 + $0xc0] sm:$0xff]
  %v1052 = vld [vmem:[%s3 + $0xc8] sm:$0xff]
  %v1053 = vld [vmem:[%s3 + $0xd0] sm:$0xff]
  %v1054 = vld [vmem:[%s3 + $0xd8] sm:$0xff]
  %v1055 = vld [vmem:[%s3 + $0xe0] sm:$0xff]
  %v1056 = vld [vmem:[%s3 + $0xe8] sm:$0xff]
  %v1057 = vld [vmem:[%s3 + $0xf0] sm:$0xff]
  %v1058 = vld [vmem:[%s3 + $0xf8] sm:$0xff]
  %v1059 = vld [vmem:[%s3 + $0x100] sm:$0xff]
  %v1060 = vld [vmem:[%s3 + $0x108] sm:$0xff]
  %v1061 = vld [vmem:[%s3 + $0x110] sm:$0xff]
  %v1062 = vld [vmem:[%s3 + $0x118] sm:$0xff]
  %v1063 = vld [vmem:[%s3 + $0x120] sm:$0xff]
  %v1064 = vld [vmem:[%s3 + $0x128] sm:$0xff]
  %v1065 = vld [vmem:[%s3 + $0x130] sm:$0xff]
  %v1066 = vld [vmem:[%s3 + $0x138] sm:$0xff]
  %v1067 = vld [vmem:[%s3 + $0x140] sm:$0xff]
  %v1068 = vld [vmem:[%s3 + $0x148] sm:$0xff]
  %v1069 = vld [vmem:[%s3 + $0x150] sm:$0xff]
  %v1070 = vld [vmem:[%s3 + $0x158] sm:$0xff]
  %v1071 = vld [vmem:[%s3 + $0x160] sm:$0xff]
  %v1072 = vld [vmem:[%s3 + $0x168] sm:$0xff]
  %v1073 = vld [vmem:[%s3 + $0x170] sm:$0xff]
  %v1074 = vld [vmem:[%s3 + $0x178] sm:$0xff]
  %v1075 = vld [vmem:[%s4] sm:$0x3]
  %v1077 = vlaneseq
  %v1078 = vshrl.u32 %v1077, 7
  %v1079 = vsub.s32 0, %v1078
  %v1080 = vrot.slane %v1075, %v1079
  %v1081 = vlaneseq
  %v1082 = vshrl.u32 %v1081, 7
  %v1083 = vsub.s32 1, %v1082
  %v1084 = vrot.slane %v1075, %v1083
  %v1135 = vunpack.c.l.b16 %v1027
  %v1136 = vunpack.c.h.b16 %v1027
  %v1137 = vunpack.c.l.b16 %v1028
  %v1138 = vunpack.c.h.b16 %v1028
  %v1139 = vunpack.c.l.b16 %v1029
  %v1140 = vunpack.c.h.b16 %v1029
  %v1141 = vunpack.c.l.b16 %v1030
  %v1142 = vunpack.c.h.b16 %v1030
  %v1143 = vunpack.c.l.b16 %v1031
  %v1144 = vunpack.c.h.b16 %v1031
  %v1145 = vunpack.c.l.b16 %v1032
  %v1146 = vunpack.c.h.b16 %v1032
  %v1147 = vunpack.c.l.b16 %v1033
  %v1148 = vunpack.c.h.b16 %v1033
  %v1149 = vunpack.c.l.b16 %v1034
  %v1150 = vunpack.c.h.b16 %v1034
  %v1151 = vunpack.c.l.b16 %v1035
  %v1152 = vunpack.c.h.b16 %v1035
  %v1153 = vunpack.c.l.b16 %v1036
  %v1154 = vunpack.c.h.b16 %v1036
  %v1155 = vunpack.c.l.b16 %v1037
  %v1156 = vunpack.c.h.b16 %v1037
  %v1157 = vunpack.c.l.b16 %v1038
  %v1158 = vunpack.c.h.b16 %v1038
  %v1159 = vunpack.c.l.b16 %v1039
  %v1160 = vunpack.c.h.b16 %v1039
  %v1161 = vunpack.c.l.b16 %v1040
  %v1162 = vunpack.c.h.b16 %v1040
  %v1163 = vunpack.c.l.b16 %v1041
  %v1164 = vunpack.c.h.b16 %v1041
  %v1165 = vunpack.c.l.b16 %v1042
  %v1166 = vunpack.c.h.b16 %v1042
  %v1167 = vunpack.c.l.b16 %v1043
  %v1168 = vunpack.c.h.b16 %v1043
  %v1169 = vunpack.c.l.b16 %v1044
  %v1170 = vunpack.c.h.b16 %v1044
  %v1171 = vunpack.c.l.b16 %v1045
  %v1172 = vunpack.c.h.b16 %v1045
  %v1173 = vunpack.c.l.b16 %v1046
  %v1174 = vunpack.c.h.b16 %v1046
  %v1175 = vunpack.c.l.b16 %v1047
  %v1176 = vunpack.c.h.b16 %v1047
  %v1177 = vunpack.c.l.b16 %v1048
  %v1178 = vunpack.c.h.b16 %v1048
  %v1179 = vunpack.c.l.b16 %v1049
  %v1180 = vunpack.c.h.b16 %v1049
  %v1181 = vunpack.c.l.b16 %v1050
  %v1182 = vunpack.c.h.b16 %v1050
  %v1183 = vunpack.c.l.b16 %v1051
  %v1184 = vunpack.c.h.b16 %v1051
  %v1185 = vunpack.c.l.b16 %v1052
  %v1186 = vunpack.c.h.b16 %v1052
  %v1187 = vunpack.c.l.b16 %v1053
  %v1188 = vunpack.c.h.b16 %v1053
  %v1189 = vunpack.c.l.b16 %v1054
  %v1190 = vunpack.c.h.b16 %v1054
  %v1191 = vunpack.c.l.b16 %v1055
  %v1192 = vunpack.c.h.b16 %v1055
  %v1193 = vunpack.c.l.b16 %v1056
  %v1194 = vunpack.c.h.b16 %v1056
  %v1195 = vunpack.c.l.b16 %v1057
  %v1196 = vunpack.c.h.b16 %v1057
  %v1197 = vunpack.c.l.b16 %v1058
  %v1198 = vunpack.c.h.b16 %v1058
  %v1199 = vunpack.c.l.b16 %v1059
  %v1200 = vunpack.c.h.b16 %v1059
  %v1201 = vunpack.c.l.b16 %v1060
  %v1202 = vunpack.c.h.b16 %v1060
  %v1203 = vunpack.c.l.b16 %v1061
  %v1204 = vunpack.c.h.b16 %v1061
  %v1205 = vunpack.c.l.b16 %v1062
  %v1206 = vunpack.c.h.b16 %v1062
  %v1207 = vunpack.c.l.b16 %v1063
  %v1208 = vunpack.c.h.b16 %v1063
  %v1209 = vunpack.c.l.b16 %v1064
  %v1210 = vunpack.c.h.b16 %v1064
  %v1211 = vunpack.c.l.b16 %v1065
  %v1212 = vunpack.c.h.b16 %v1065
  %v1213 = vunpack.c.l.b16 %v1066
  %v1214 = vunpack.c.h.b16 %v1066
  %v1215 = vunpack.c.l.b16 %v1067
  %v1216 = vunpack.c.h.b16 %v1067
  %v1217 = vunpack.c.l.b16 %v1068
  %v1218 = vunpack.c.h.b16 %v1068
  %v1219 = vunpack.c.l.b16 %v1069
  %v1220 = vunpack.c.h.b16 %v1069
  %v1221 = vunpack.c.l.b16 %v1070
  %v1222 = vunpack.c.h.b16 %v1070
  %v1223 = vunpack.c.l.b16 %v1071
  %v1224 = vunpack.c.h.b16 %v1071
  %v1225 = vunpack.c.l.b16 %v1072
  %v1226 = vunpack.c.h.b16 %v1072
  %v1227 = vunpack.c.l.b16 %v1073
  %v1228 = vunpack.c.h.b16 %v1073
  %v1229 = vunpack.c.l.b16 %v1074
  %v1230 = vunpack.c.h.b16 %v1074
  %v1231 = vpack.c.b16 %v1137, %v1135
  %v1232 = vpack.c.b16 %v1138, %v1136
  %v1233 = vpack.c.b16 %v1141, %v1139
  %v1234 = vpack.c.b16 %v1142, %v1140
  %v1235 = vpack.c.b16 %v1145, %v1143
  %v1236 = vpack.c.b16 %v1146, %v1144
  %v1237 = vpack.c.b16 %v1149, %v1147
  %v1238 = vpack.c.b16 %v1150, %v1148
  %v1239 = vpack.c.b16 %v1153, %v1151
  %v1240 = vpack.c.b16 %v1154, %v1152
  %v1241 = vpack.c.b16 %v1157, %v1155
  %v1242 = vpack.c.b16 %v1158, %v1156
  %v1243 = vpack.c.b16 %v1161, %v1159
  %v1244 = vpack.c.b16 %v1162, %v1160
  %v1245 = vpack.c.b16 %v1165, %v1163
  %v1246 = vpack.c.b16 %v1166, %v1164
  %v1247 = vpack.c.b16 %v1169, %v1167
  %v1248 = vpack.c.b16 %v1170, %v1168
  %v1249 = vpack.c.b16 %v1173, %v1171
  %v1250 = vpack.c.b16 %v1174, %v1172
  %v1251 = vpack.c.b16 %v1177, %v1175
  %v1252 = vpack.c.b16 %v1178, %v1176
  %v1253 = vpack.c.b16 %v1181, %v1179
  %v1254 = vpack.c.b16 %v1182, %v1180
  %v1255 = vpack.c.b16 %v1185, %v1183
  %v1256 = vpack.c.b16 %v1186, %v1184
  %v1257 = vpack.c.b16 %v1189, %v1187
  %v1258 = vpack.c.b16 %v1190, %v1188
  %v1259 = vpack.c.b16 %v1193, %v1191
  %v1260 = vpack.c.b16 %v1194, %v1192
  %v1261 = vpack.c.b16 %v1197, %v1195
  %v1262 = vpack.c.b16 %v1198, %v1196
  %v1263 = vpack.c.b16 %v1201, %v1199
  %v1264 = vpack.c.b16 %v1202, %v1200
  %v1265 = vpack.c.b16 %v1205, %v1203
  %v1266 = vpack.c.b16 %v1206, %v1204
  %v1267 = vpack.c.b16 %v1209, %v1207
  %v1268 = vpack.c.b16 %v1210, %v1208
  %v1269 = vpack.c.b16 %v1213, %v1211
  %v1270 = vpack.c.b16 %v1214, %v1212
  %v1271 = vpack.c.b16 %v1217, %v1215
  %v1272 = vpack.c.b16 %v1218, %v1216
  %v1273 = vpack.c.b16 %v1221, %v1219
  %v1274 = vpack.c.b16 %v1222, %v1220
  %v1275 = vpack.c.b16 %v1225, %v1223
  %v1276 = vpack.c.b16 %v1226, %v1224
  %v1277 = vpack.c.b16 %v1229, %v1227
  %v1278 = vpack.c.b16 %v1230, %v1228
  %1327 = vmatprep.subr.bf16.mxu0 %v1232
  %1328 = vmatpush1.bf16.msra.mxu0 %v1231
  %1329 = vmatprep.subr.bf16.mxu0 %v1234
  %1330 = vmatpush1.bf16.msra.mxu0 %v1233
  %1331 = vmatprep.subr.bf16.mxu0 %v1236
  %1332 = vmatpush1.bf16.msra.mxu0 %v1235
  %1333 = vmatprep.subr.bf16.mxu0 %v1238
  %1334 = vmatpush1.bf16.msra.mxu0 %v1237
  %1335 = vmatprep.subr.bf16.mxu0 %v1240
  %1336 = vmatpush1.bf16.msra.mxu0 %v1239
  %1337 = vmatprep.subr.bf16.mxu0 %v1242
  %1338 = vmatpush1.bf16.msra.mxu0 %v1241
  %1339 = vmatprep.subr.bf16.mxu0 %v1244
  %1340 = vmatpush1.bf16.msra.mxu0 %v1243
  %1341 = vmatprep.subr.bf16.mxu0 %v1246
  %1342 = vmatpush1.bf16.msra.mxu0 %v1245
  %1343 = vmatprep.subr.bf16.mxu0 %v1248
  %1344 = vmatpush1.bf16.msra.mxu0 %v1247
  %1345 = vmatprep.subr.bf16.mxu0 %v1250
  %1346 = vmatpush1.bf16.msra.mxu0 %v1249
  %1347 = vmatprep.subr.bf16.mxu0 %v1252
  %1348 = vmatpush1.bf16.msra.mxu0 %v1251
  %1349 = vmatprep.subr.bf16.mxu0 %v1254
  %1350 = vmatpush1.bf16.msra.mxu0 %v1253
  %1351 = vmatprep.subr.bf16.mxu0 %v1256
  %1352 = vmatpush1.bf16.msra.mxu0 %v1255
  %1353 = vmatprep.subr.bf16.mxu0 %v1258
  %1354 = vmatpush1.bf16.msra.mxu0 %v1257
  %1355 = vmatprep.subr.bf16.mxu0 %v1260
  %1356 = vmatpush1.bf16.msra.mxu0 %v1259
  %1357 = vmatprep.subr.bf16.mxu0 %v1262
  %1358 = vmatpush1.bf16.msra.mxu0 %v1261
  %1359 = vmatprep.mubr.bf16.mxu0 %v1025
  %1360 = vmatmul.mubr.bf16.gmra.mrb[0].mxu0 %v1024
  %v1361 = vpop.f32.mrb[0].mxu0
  %v1362 = vadd.f32 %v1080, %v1361
  %v1363 = vpop.f32.mrb[0].mxu0
  %v1364 = vadd.f32 %v1084, %v1363
  %v1365 = vpop.f32.mrb[0].mxu0
  %v1366 = vadd.f32 %v1080, %v1365
  %v1367 = vpop.f32.mrb[0].mxu0
  %v1368 = vadd.f32 %v1084, %v1367
  %1369 = vdwg.mxu0
  %1370 = vmatprep.subr.bf16.mxu0 %v1264
  %1371 = vmatpush1.bf16.msra.mxu0 %v1263
  %1372 = vmatprep.subr.bf16.mxu0 %v1266
  %1373 = vmatpush1.bf16.msra.mxu0 %v1265
  %1374 = vmatprep.subr.bf16.mxu0 %v1268
  %1375 = vmatpush1.bf16.msra.mxu0 %v1267
  %1376 = vmatprep.subr.bf16.mxu0 %v1270
  %1377 = vmatpush1.bf16.msra.mxu0 %v1269
  %1378 = vmatprep.subr.bf16.mxu0 %v1272
  %1379 = vmatpush1.bf16.msra.mxu0 %v1271
  %1380 = vmatprep.subr.bf16.mxu0 %v1274
  %1381 = vmatpush1.bf16.msra.mxu0 %v1273
  %1382 = vmatprep.subr.bf16.mxu0 %v1276
  %1383 = vmatpush1.bf16.msra.mxu0 %v1275
  %1384 = vmatprep.subr.bf16.mxu0 %v1278
  %1385 = vmatpush1.bf16.msra.mxu0 %v1277
  %1386 = vmatprep.subr.bf16.mxu0 0
  %1387 = vmatpush1.bf16.msra.mxu0 0
  %1388 = vmatprep.subr.bf16.mxu0 0
  %1389 = vmatpush1.bf16.msra.mxu0 0
  %1390 = vmatprep.subr.bf16.mxu0 0
  %1391 = vmatpush1.bf16.msra.mxu0 0
  %1392 = vmatprep.subr.bf16.mxu0 0
  %1393 = vmatpush1.bf16.msra.mxu0 0
  %1394 = vmatprep.subr.bf16.mxu0 0
  %1395 = vmatpush1.bf16.msra.mxu0 0
  %1396 = vmatprep.subr.bf16.mxu0 0
  %1397 = vmatpush1.bf16.msra.mxu0 0
  %1398 = vmatprep.subr.bf16.mxu0 0
  %1399 = vmatpush1.bf16.msra.mxu0 0
  %1400 = vmatprep.subr.bf16.mxu0 0
  %1401 = vmatpush1.bf16.msra.mxu0 0
  %1402 = vmatprep.mubr.bf16.mxu0 0
  %1403 = vmatmul.mubr.bf16.gmra.mrb[0].mxu0 %v1026
  %v1404 = vpop.f32.mrb[0].mxu0
  %v1405 = vadd.f32 %v1362, %v1404
  %v1406 = vpop.f32.mrb[0].mxu0
  %v1407 = vadd.f32 %v1364, %v1406
  %v1408 = vpop.f32.mrb[0].mxu0
  %v1409 = vadd.f32 %v1366, %v1408
  %v1410 = vpop.f32.mrb[0].mxu0
  %v1411 = vadd.f32 %v1368, %v1410
  %1412 = vdwg.mxu0
  %v1413 = vmax.f32 %v1405, 0.0
  %v1414 = vmax.f32 %v1407, 0.0
  %v1415 = vmax.f32 %v1409, 0.0
  %v1416 = vmax.f32 %v1411, 0.0
  %v1417 = vpack.c.bf16 %v1415, %v1413
  %v1418 = vpack.c.bf16 %v1416, %v1414
  %v1419 = vld [vmem:[%s5] sm:$0xf]
  %v1420 = vld [vmem:[%s5 + $0x4] sm:$0xf]
  %v1421 = vld [vmem:[%s5 + $0x8] sm:$0xf]
  %v1422 = vld [vmem:[%s5 + $0xc] sm:$0xf]
  %v1423 = vld [vmem:[%s5 + $0x10] sm:$0xf]
  %v1424 = vld [vmem:[%s5 + $0x14] sm:$0xf]
  %v1425 = vld [vmem:[%s5 + $0x18] sm:$0xf]
  %v1426 = vld [vmem:[%s5 + $0x1c] sm:$0xf]
  %v1427 = vld [vmem:[%s5 + $0x20] sm:$0xf]
  %v1428 = vld [vmem:[%s5 + $0x24] sm:$0xf]
  %v1429 = vld [vmem:[%s5 + $0x28] sm:$0xf]
  %v1430 = vld [vmem:[%s5 + $0x2c] sm:$0xf]
  %v1431 = vld [vmem:[%s5 + $0x30] sm:$0xf]
  %v1432 = vld [vmem:[%s5 + $0x34] sm:$0xf]
  %v1433 = vld [vmem:[%s5 + $0x38] sm:$0xf]
  %v1434 = vld [vmem:[%s5 + $0x3c] sm:$0xf]
  %v1435 = vld [vmem:[%s5 + $0x40] sm:$0xf]
  %v1436 = vld [vmem:[%s5 + $0x44] sm:$0xf]
  %v1437 = vld [vmem:[%s5 + $0x48] sm:$0xf]
  %v1438 = vld [vmem:[%s5 + $0x4c] sm:$0xf]
  %v1439 = vld [vmem:[%s5 + $0x50] sm:$0xf]
  %v1440 = vld [vmem:[%s5 + $0x54] sm:$0xf]
  %v1441 = vld [vmem:[%s5 + $0x58] sm:$0xf]
  %v1442 = vld [vmem:[%s5 + $0x5c] sm:$0xf]
  %v1443 = vld [vmem:[%s5 + $0x60] sm:$0xf]
  %v1444 = vld [vmem:[%s5 + $0x64] sm:$0xf]
  %v1445 = vld [vmem:[%s5 + $0x68] sm:$0xf]
  %v1446 = vld [vmem:[%s5 + $0x6c] sm:$0xf]
  %v1447 = vld [vmem:[%s5 + $0x70] sm:$0xf]
  %v1448 = vld [vmem:[%s5 + $0x74] sm:$0xf]
  %v1449 = vld [vmem:[%s5 + $0x78] sm:$0xf]
  %v1450 = vld [vmem:[%s5 + $0x7c] sm:$0xf]
  %v1451 = vld [vmem:[%s6] sm:$0x1]
  %v1453 = vlaneseq
  %v1454 = vshrl.u32 %v1453, 7
  %v1455 = vsub.s32 0, %v1454
  %v1456 = vrot.slane %v1451, %v1455
  %v1490 = vunpack.c.l.b16 %v1419
  %v1491 = vunpack.c.l.b16 %v1420
  %v1492 = vunpack.c.l.b16 %v1421
  %v1493 = vunpack.c.l.b16 %v1422
  %v1494 = vunpack.c.l.b16 %v1423
  %v1495 = vunpack.c.l.b16 %v1424
  %v1496 = vunpack.c.l.b16 %v1425
  %v1497 = vunpack.c.l.b16 %v1426
  %v1498 = vunpack.c.l.b16 %v1427
  %v1499 = vunpack.c.l.b16 %v1428
  %v1500 = vunpack.c.l.b16 %v1429
  %v1501 = vunpack.c.l.b16 %v1430
  %v1502 = vunpack.c.l.b16 %v1431
  %v1503 = vunpack.c.l.b16 %v1432
  %v1504 = vunpack.c.l.b16 %v1433
  %v1505 = vunpack.c.l.b16 %v1434
  %v1506 = vunpack.c.l.b16 %v1435
  %v1507 = vunpack.c.l.b16 %v1436
  %v1508 = vunpack.c.l.b16 %v1437
  %v1509 = vunpack.c.l.b16 %v1438
  %v1510 = vunpack.c.l.b16 %v1439
  %v1511 = vunpack.c.l.b16 %v1440
  %v1512 = vunpack.c.l.b16 %v1441
  %v1513 = vunpack.c.l.b16 %v1442
  %v1514 = vunpack.c.l.b16 %v1443
  %v1515 = vunpack.c.l.b16 %v1444
  %v1516 = vunpack.c.l.b16 %v1445
  %v1517 = vunpack.c.l.b16 %v1446
  %v1518 = vunpack.c.l.b16 %v1447
  %v1519 = vunpack.c.l.b16 %v1448
  %v1520 = vunpack.c.l.b16 %v1449
  %v1521 = vunpack.c.l.b16 %v1450
  %v1522 = vpack.c.b16 %v1491, %v1490
  %v1523 = vpack.c.b16 %v1493, %v1492
  %v1524 = vpack.c.b16 %v1495, %v1494
  %v1525 = vpack.c.b16 %v1497, %v1496
  %v1526 = vpack.c.b16 %v1499, %v1498
  %v1527 = vpack.c.b16 %v1501, %v1500
  %v1528 = vpack.c.b16 %v1503, %v1502
  %v1529 = vpack.c.b16 %v1505, %v1504
  %v1530 = vpack.c.b16 %v1507, %v1506
  %v1531 = vpack.c.b16 %v1509, %v1508
  %v1532 = vpack.c.b16 %v1511, %v1510
  %v1533 = vpack.c.b16 %v1513, %v1512
  %v1534 = vpack.c.b16 %v1515, %v1514
  %v1535 = vpack.c.b16 %v1517, %v1516
  %v1536 = vpack.c.b16 %v1519, %v1518
  %v1537 = vpack.c.b16 %v1521, %v1520
  %1554 = vmatprep.subr.bf16.mxu0 0
  %1555 = vmatpush1.bf16.msra.mxu0 %v1522
  %1556 = vmatprep.subr.bf16.mxu0 0
  %1557 = vmatpush1.bf16.msra.mxu0 %v1523
  %1558 = vmatprep.subr.bf16.mxu0 0
  %1559 = vmatpush1.bf16.msra.mxu0 %v1524
  %1560 = vmatprep.subr.bf16.mxu0 0
  %1561 = vmatpush1.bf16.msra.mxu0 %v1525
  %1562 = vmatprep.subr.bf16.mxu0 0
  %1563 = vmatpush1.bf16.msra.mxu0 %v1526
  %1564 = vmatprep.subr.bf16.mxu0 0
  %1565 = vmatpush1.bf16.msra.mxu0 %v1527
  %1566 = vmatprep.subr.bf16.mxu0 0
  %1567 = vmatpush1.bf16.msra.mxu0 %v1528
  %1568 = vmatprep.subr.bf16.mxu0 0
  %1569 = vmatpush1.bf16.msra.mxu0 %v1529
  %1570 = vmatprep.subr.bf16.mxu0 0
  %1571 = vmatpush1.bf16.msra.mxu0 %v1530
  %1572 = vmatprep.subr.bf16.mxu0 0
  %1573 = vmatpush1.bf16.msra.mxu0 %v1531
  %1574 = vmatprep.subr.bf16.mxu0 0
  %1575 = vmatpush1.bf16.msra.mxu0 %v1532
  %1576 = vmatprep.subr.bf16.mxu0 0
  %1577 = vmatpush1.bf16.msra.mxu0 %v1533
  %1578 = vmatprep.subr.bf16.mxu0 0
  %1579 = vmatpush1.bf16.msra.mxu0 %v1534
  %1580 = vmatprep.subr.bf16.mxu0 0
  %1581 = vmatpush1.bf16.msra.mxu0 %v1535
  %1582 = vmatprep.subr.bf16.mxu0 0
  %1583 = vmatpush1.bf16.msra.mxu0 %v1536
  %1584 = vmatprep.subr.bf16.mxu0 0
  %1585 = vmatpush1.bf16.msra.mxu0 %v1537
  %1586 = vmatprep.mubr.bf16.mxu0 %v1418
  %1587 = vmatmul.mubr.bf16.gmra.mrb[0].mxu0 %v1417
  %v1588 = vpop.f32.mrb[0].mxu0
  %v1589 = vadd.f32 %v1456, %v1588
  %v1590 = vpop.f32.mrb[0].mxu0
  %v1591 = vpop.f32.mrb[0].mxu0
  %v1592 = vadd.f32 %v1456, %v1591
  %v1593 = vpop.f32.mrb[0].mxu0
  %1594 = vdwg.mxu0
  %v1595 = vmax.f32 %v1589, 0.0
  %v1596 = vmax.f32 %v1592, 0.0
  %v1597 = vlaneseq
  %v1598 = vand.u32 %v1597, 127
  %vm1599 = vcmp.lt.s32.totalorder %v1598, 26
  %v1600 = vsel %vm1599, %v1595, -1e+30
  %v1601 = vsel %vm1599, %v1596, -1e+30
  %1602 = vmax.xlane.f32.xlu0 %v1600
  %v1603 = vpop.xlane.xlu0 %1602
  %1604 = vmax.xlane.f32.xlu0 %v1601
  %v1605 = vpop.xlane.xlu0 %1604
  %v1606 = vsub.f32 %v1600, %v1603
  %v1607 = vsub.f32 %v1601, %v1605
  %v1608 = vmul.f32 %v1606, 1.442695
  %v1609 = vpow.pop %v1608
  %v1610 = vmul.f32 %v1607, 1.442695
  %v1611 = vpow.pop %v1610
  %1612 = vadd.xlane.f32.xlu0 %v1609
  %v1613 = vpop.xlane.xlu0 %1612
  %1614 = vadd.xlane.f32.xlu0 %v1611
  %v1615 = vpop.xlane.xlu0 %1614
  %v1616 = vrcp.pop %v1613
  %v1617 = vmul.f32 %v1609, %v1616
  %v1618 = vrcp.pop %v1615
  %v1619 = vmul.f32 %v1611, %v1618
  %1620 = vst [vmem:[%s7] sm:$0xff] %v1617
  %1621 = vst [vmem:[%s7 + $0x8] sm:$0xff] %v1619
  // Predicated region
  $region30: #{gesture_cnn_forward.1} parent=0 // pred_check
    _
  $region31: #{gesture_cnn_forward.1} parent=0 // pred_check_branch
    %1623 = sbr.rel (0) target = $region33
  $region32: #{gesture_cnn_forward.1} parent=0 // pred_region
    _
  $region33: #{gesture_cnn_forward.1} parent=0 // pred_fallthru
    _
  // Predicated region
  $region34: #{gesture_cnn_forward.1} parent=0 // pred_check
    _
  $region35: #{gesture_cnn_forward.1} parent=0 // pred_check_branch
    %1625 = sbr.rel (0) target = $region37
  $region36: #{gesture_cnn_forward.1} parent=0 // pred_region
    _
  $region37: #{gesture_cnn_forward.1} parent=0 // pred_fallthru
    _

</llo_original>
